<compile_context>
chip_gen: v5e
topology: v5e:2x2
jax: 0.10.0
libtpu: 0.0.40
codegen_flags: <defaults>
</compile_context>

<pallas_src>
import jax
import jax.numpy as jnp
from jax.experimental import pallas as pl
from jax.experimental.pallas import tpu as pltpu


def _round_up(x, m):
    return ((x + m - 1) // m) * m


def _fused_conv_kernel(lhs_ref, w_ref, b_ref, o_ref):
    # lhs_ref: (tm, K_pad)      -- im2col patch rows for one (batch, row-tile)
    # w_ref:   (K_pad, Cout_pad)   pre-blended weights (sublane/lane padded)
    # b_ref:   (1, Cout_pad)       pre-blended bias    (lane padded)
    # o_ref:   (tm, Cout_pad)      lane-dense output slab
    o_ref[...] = (
        jnp.dot(lhs_ref[...], w_ref[...], preferred_element_type=jnp.float32)
        + b_ref[...]
    ).astype(o_ref.dtype)


def relationship_convolution(x_nchw, w1, b1, w2, b2, r):
    """x_nchw: (N, Cin, H, W) f32
       w1, w2: (Cout, Cin, 3, 3) f32 (PyTorch OIHW)
       b1, b2: (Cout,) f32
       r: blend factor (python float or traced scalar)
       returns (N, Cout, H, W) f32."""
    N, Cin, H, W = x_nchw.shape
    Cout = w1.shape[0]
    K = 9 * Cin
    K_pad = _round_up(K, 8)            # sublane-aligned contraction dim
    Cout_pad = _round_up(Cout, 128)    # lane-dense output width
    HW = H * W

    # Row tiling: single tile for small images, 512-row tiles otherwise.
    hw8 = _round_up(HW, 8)
    tm = hw8 if hw8 <= 512 else 512
    HW_pad = _round_up(HW, tm)

    # ---- wrapper-side prep (tiny XLA ops vs. the matmul at these shapes) ----
    r = jnp.asarray(r, dtype=x_nchw.dtype)
    w_blend = w1 * (1.0 - r) + w2 * r                    # (Cout, Cin, 3, 3)
    b_blend = b1 * (1.0 - r) + b2 * r                    # (Cout,)

    # OIHW -> (kh, kw, cin, cout) -> (9*Cin, Cout), row-major over (kh,kw,cin).
    w_mat = jnp.transpose(w_blend, (2, 3, 1, 0)).reshape(K, Cout)
    w_mat = jnp.pad(w_mat, ((0, K_pad - K), (0, Cout_pad - Cout)))
    b_mat = jnp.pad(b_blend, (0, Cout_pad - Cout)).reshape(1, Cout_pad)

    # im2col: NCHW -> NHWC -> pad -> (N, H*W, 9*Cin) with (kh, kw, cin) order.
    x_nhwc = jnp.transpose(x_nchw, (0, 2, 3, 1))                  # (N,H,W,Cin)
    x_padded = jnp.pad(x_nhwc, ((0, 0), (1, 1), (1, 1), (0, 0)))  # (N,H+2,W+2,Cin)
    patches = [x_padded[:, kh:kh + H, kw:kw + W, :]
               for kh in range(3) for kw in range(3)]
    lhs = jnp.concatenate(patches, axis=-1).reshape(N, HW, K)
    lhs = jnp.pad(lhs, ((0, 0), (0, HW_pad - HW), (0, K_pad - K)))

    # ---- single-matmul Pallas kernel per (batch, row-tile) grid step ----
    out = pl.pallas_call(
        _fused_conv_kernel,
        out_shape=jax.ShapeDtypeStruct((N, HW_pad, Cout_pad), jnp.float32),
        grid_spec=pltpu.PrefetchScalarGridSpec(
            num_scalar_prefetch=0,
            grid=(N, HW_pad // tm),
            in_specs=[
                pl.BlockSpec((None, tm, K_pad), lambda b, m: (b, m, 0)),
                pl.BlockSpec((K_pad, Cout_pad), lambda b, m: (0, 0)),
                pl.BlockSpec((1, Cout_pad), lambda b, m: (0, 0)),
            ],
            out_specs=pl.BlockSpec((None, tm, Cout_pad), lambda b, m: (b, m, 0)),
        ),
        compiler_params=pltpu.CompilerParams(
            dimension_semantics=("parallel", "parallel")),
    )(lhs, w_mat, b_mat)

    # Slice off row/lane padding, restore NCHW.
    out_nhwc = out[:, :HW, :Cout].reshape(N, H, W, Cout)
    return jnp.transpose(out_nhwc, (0, 3, 1, 2))                  # (N,Cout,H,W)


def _reference(x_nchw, w, b):
    """Pure-JAX reference conv2d(3x3, pad=1) in NCHW, for correctness check."""
    out = jax.lax.conv_general_dilated(
        x_nchw, w, window_strides=(1, 1), padding=((1, 1), (1, 1)),
        dimension_numbers=("NCHW", "OIHW", "NCHW"))
    return out + b.reshape(1, -1, 1, 1)


if __name__ == "__main__":
    # Small shapes consistent with the module: Conv2d(Cin=4, Cout=32, k=3, pad=1)
    N, Cin, H, W, Cout = 2, 4, 16, 16, 32
    r = 0.3

    key = jax.random.PRNGKey(0)
    kx, kw1, kb1, kw2, kb2 = jax.random.split(key, 5)
    x = jax.random.normal(kx, (N, Cin, H, W), jnp.float32)
    w1 = jax.random.normal(kw1, (Cout, Cin, 3, 3), jnp.float32) * 0.1
    b1 = jax.random.normal(kb1, (Cout,), jnp.float32) * 0.1
    w2 = jax.random.normal(kw2, (Cout, Cin, 3, 3), jnp.float32) * 0.1
    b2 = jax.random.normal(kb2, (Cout,), jnp.float32) * 0.1

    out = relationship_convolution(x, w1, b1, w2, b2, r)
    out = jax.block_until_ready(out)

    # Correctness check against pure-JAX conv reference (two branches blended).
    ref = _reference(x, w1, b1) * (1.0 - r) + _reference(x, w2, b2) * r
    assert out.shape == (N, Cout, H, W)
    assert jnp.allclose(out, ref, atol=1e-4, rtol=1e-4)

    print("KERNEL_OK")
</pallas_src>

<mosaic_0001>
module attributes {stable_mosaic.version = 11 : i64} {
  func.func @_fused_conv_kernel(%arg0: i32, %arg1: i32, %arg2: memref<1x256x40xf32, #tpu.memory_space<vmem>>, %arg3: memref<40x128xf32, #tpu.memory_space<vmem>>, %arg4: memref<1x128xf32, #tpu.memory_space<vmem>>, %arg5: memref<1x256x128xf32, #tpu.memory_space<vmem>>) attributes {dimension_semantics = [#tpu.dimension_semantics<parallel>, #tpu.dimension_semantics<parallel>], iteration_bounds = array<i64: 2, 1>, scalar_prefetch = 0 : i64, scratch_operands = 0 : i64, tpu.core_type = #tpu.core_type<tc>, window_params = [{transform_indices = @transform_0, window_bounds = array<i64: 1, 256, 40>}, {pipeline_mode = #tpu.pipeline_mode<synchronous>, transform_indices = @transform_1, window_bounds = array<i64: 40, 128>}, {pipeline_mode = #tpu.pipeline_mode<synchronous>, transform_indices = @transform_2, window_bounds = array<i64: 1, 128>}, {transform_indices = @transform_3, window_bounds = array<i64: 1, 256, 128>}]} {
    %c0 = arith.constant 0 : index
    %c0_0 = arith.constant 0 : index
    %c0_1 = arith.constant 0 : index
    %0 = vector.load %arg2[%c0, %c0_0, %c0_1] : memref<1x256x40xf32, #tpu.memory_space<vmem>>, vector<1x256x40xf32>
    %1 = vector.shape_cast %0 : vector<1x256x40xf32> to vector<256x40xf32>
    %c0_2 = arith.constant 0 : index
    %c0_3 = arith.constant 0 : index
    %2 = vector.load %arg3[%c0_2, %c0_3] : memref<40x128xf32, #tpu.memory_space<vmem>>, vector<40x128xf32>
    %cst = arith.constant dense<0.000000e+00> : vector<256x128xf32>
    %3 = tpu.matmul %1, %2, %cst {dimension_numbers = #tpu.dot_dimension_numbers<[1], [0], [0], [1], [0, 0, 1, 1], [], []>} : vector<256x40xf32>, vector<40x128xf32>, vector<256x128xf32> -> vector<256x128xf32>
    %c0_4 = arith.constant 0 : index
    %c0_5 = arith.constant 0 : index
    %4 = vector.load %arg4[%c0_4, %c0_5] : memref<1x128xf32, #tpu.memory_space<vmem>>, vector<1x128xf32>
    %5 = vector.broadcast %4 : vector<1x128xf32> to vector<256x128xf32>
    %6 = arith.addf %3, %5 : vector<256x128xf32>
    %c0_6 = arith.constant 0 : index
    %c0_7 = arith.constant 0 : index
    %c0_8 = arith.constant 0 : index
    %7 = vector.load %arg5[%c0_6, %c0_7, %c0_8] : memref<1x256x128xf32, #tpu.memory_space<vmem>>, vector<1x256x128xf32>
    %8 = vector.shape_cast %7 : vector<1x256x128xf32> to vector<256x128xf32>
    %9 = vector.shape_cast %6 : vector<256x128xf32> to vector<1x256x128xf32>
    tpu.vector_store %arg5[%c0_6, %c0_7, %c0_8], %9 {strides = array<i32>} : memref<1x256x128xf32, #tpu.memory_space<vmem>>, vector<1x256x128xf32>,
    return
  }
  func.func @transform_0(%arg0: i32, %arg1: i32) -> (i32, i32, i32) {
    %c0_i32 = arith.constant 0 : i32
    %c0_i32_0 = arith.constant 0 : i32
    return %arg0, %arg1, %c0_i32 : i32, i32, i32
  }
  func.func @transform_1(%arg0: i32, %arg1: i32) -> (i32, i32) {
    %c0_i32 = arith.constant 0 : i32
    %c0_i32_0 = arith.constant 0 : i32
    %c0_i32_1 = arith.constant 0 : i32
    return %c0_i32, %c0_i32_0 : i32, i32
  }
  func.func @transform_2(%arg0: i32, %arg1: i32) -> (i32, i32) {
    %c0_i32 = arith.constant 0 : i32
    %c0_i32_0 = arith.constant 0 : i32
    %c0_i32_1 = arith.constant 0 : i32
    return %c0_i32, %c0_i32_0 : i32, i32
  }
  func.func @transform_3(%arg0: i32, %arg1: i32) -> (i32, i32, i32) {
    %c0_i32 = arith.constant 0 : i32
    %c0_i32_0 = arith.constant 0 : i32
    return %arg0, %arg1, %c0_i32 : i32, i32, i32
  }
}

</mosaic_0001>

<llo_original>
// kernel: tpu_custom_call.1
$region0: #{tpu_custom_call.1}
  #allocation0 [shape = 'u32[]', space=smem, size = 0x4, offset = 0x4, fixed_abs, tag = 'smem constant byte address 0x4 - core index']
  #allocation1 [shape = 'u32[72,128]{1,0:T(1,128)}', space=vmem, size = 0x9000, scoped, tag = 'internal scratch']
  %s0 = inlined_call_operand.vmem [shape: f32[2,256,40], index: 0, kind: input, shape index: {}]
  %s1 = inlined_call_operand.vmem [shape: f32[40,128], index: 1, kind: input, shape index: {}]
  %s2 = inlined_call_operand.vmem [shape: f32[1,128], index: 2, kind: input, shape index: {}]
  %s3 = inlined_call_operand.hbm [shape: f32[2,256,128], index: 3, kind: output, shape index: {}]
  %s4 = sld [smem:[#allocation0]]
  $region45: #{tpu_custom_call.1} parent=0
    _
  %s6 = ssub.s32 1, %s4
  %s7 = scalar_select 0, %s6, %s4
  $region1: #{tpu_custom_call.1} parent=0
    #allocation2 [shape = 'u8[262144]{0}', space=vmem, size = 0x40000, scoped, tag = 'output window, operand 0']
    #allocation3 [shape = 's32[2]{0}', space=sflag, size = 0x8, scoped, tag = 'scoped memory for tpu_custom_call.1']
    %8 = vsyncpa [#allocation3], 0
    %s9 = scalar_lea.sflag [#allocation3], 1
    %10 = vsyncpa %s9, 0
    loop: start=0, step=1, limit=4
    $region2: #{tpu_custom_call.1} parent=1 // loop_pre_header
      _
    $region3: #{tpu_custom_call.1} parent=1 // loop_header
      %s12 = sphi 0, %s16
      %p13 = scmp.ge.s32.totalorder %s12, 4
      %s19 = sphi 0, %s31
      %s20 = sphi 0, %s27
      %s21 = sphi 0, %s19
      %s22 = sphi 0, %s20
      %s23 = sphi 0, %s21
      %s24 = sphi 0, %s22
      %s36 = sphi 0, %s38
      %s39 = sphi 0, %s36
      %s40 = sphi 0, %s39
      %s56 = sphi 0, %s40
      %s60 = sphi 0, %s60
      %s62 = sphi 0, %s60
      %s63 = sphi 0, %s62
      %s77 = sphi 0, %s63
      %s81 = sphi 0, %s81
      %s83 = sphi 0, %s81
      %s84 = sphi 0, %s83
      %s98 = sphi 0, %s84
      %s106 = sphi 0, %s108
      %s109 = sphi 0, %s106
      %s110 = sphi 0, %s109
      %s126 = sphi 0, %s110
    $region4: #{tpu_custom_call.1} parent=1 // loop_header_branch
      %15 = sbr.rel (%p13) target = $region8
    $region5: #{tpu_custom_call.1} parent=1 // loop_body
      %s17 = ssub.s32 %s12, 1
      %s18 = ssub.s32 %s12, 2
      %s25 = sadd.s32 1, %s20
      %p26 = scmp.ge.s32.totalorder %s25, 1
      %s27 = scalar_select %p26, 0, %s25
      %s28 = sadd.s32 1, %s19
      %s29 = scalar_select %p26, %s28, %s19
      %p30 = scmp.ge.s32.totalorder %s29, 2
      %s31 = scalar_select %p30, 0, %s29
      %s32 = ssub.s32 %s19, %s31
      %s33 = ssub.s32 %s20, %s27
      %s34 = sor.u32 %s32, %s33
      %p35 = scmp.eq.s32.totalorder %s34, 0
      %s37 = sadd.s32 %s36, 1
      %s38 = scalar_select %p35, %s36, %s37
      %p41 = pneg %p35
      %p42 = scmp.eq.s32.totalorder %s12, 1
      %p43 = por %p41, %p42
      %p44 = scmp.ne.s32.totalorder %s36, %s39
      %p45 = scmp.eq.s32.totalorder %s12, 0
      %p46 = por %p44, %p45
      %p47 = scmp.ne.s32.totalorder %s36, %s39
      %p48 = scmp.eq.s32.totalorder %s17, 1
      %p49 = por %p47, %p48
      %p50 = scmp.ne.s32.totalorder %s39, %s40
      %p51 = scmp.eq.s32.totalorder %s17, 0
      %p52 = por %p50, %p51
      %p53 = scmp.ne.s32.totalorder %s39, %s40
      %p54 = scmp.eq.s32.totalorder %s18, 1
      %p55 = por %p53, %p54
      %p57 = scmp.ne.s32.totalorder %s40, %s56
      %p58 = scmp.eq.s32.totalorder %s18, 0
      %p59 = por %p57, %p58
      %s61 = sadd.s32 %s60, 1
      %p64 = scmp.eq.s32.totalorder %s12, 1
      %p65 = scmp.ne.s32.totalorder %s60, %s62
      %p66 = scmp.eq.s32.totalorder %s12, 0
      %p67 = por %p65, %p66
      %p68 = scmp.ne.s32.totalorder %s60, %s62
      %p69 = scmp.eq.s32.totalorder %s17, 1
      %p70 = por %p68, %p69
      %p71 = scmp.ne.s32.totalorder %s62, %s63
      %p72 = scmp.eq.s32.totalorder %s17, 0
      %p73 = por %p71, %p72
      %p74 = scmp.ne.s32.totalorder %s62, %s63
      %p75 = scmp.eq.s32.totalorder %s18, 1
      %p76 = por %p74, %p75
      %p78 = scmp.ne.s32.totalorder %s63, %s77
      %p79 = scmp.eq.s32.totalorder %s18, 0
      %p80 = por %p78, %p79
      %s82 = sadd.s32 %s81, 1
      %p85 = scmp.eq.s32.totalorder %s12, 1
      %p86 = scmp.ne.s32.totalorder %s81, %s83
      %p87 = scmp.eq.s32.totalorder %s12, 0
      %p88 = por %p86, %p87
      %p89 = scmp.ne.s32.totalorder %s81, %s83
      %p90 = scmp.eq.s32.totalorder %s17, 1
      %p91 = por %p89, %p90
      %p92 = scmp.ne.s32.totalorder %s83, %s84
      %p93 = scmp.eq.s32.totalorder %s17, 0
      %p94 = por %p92, %p93
      %p95 = scmp.ne.s32.totalorder %s83, %s84
      %p96 = scmp.eq.s32.totalorder %s18, 1
      %p97 = por %p95, %p96
      %p99 = scmp.ne.s32.totalorder %s84, %s98
      %p100 = scmp.eq.s32.totalorder %s18, 0
      %p101 = por %p99, %p100
      %s102 = ssub.s32 %s19, %s31
      %s103 = ssub.s32 %s20, %s27
      %s104 = sor.u32 %s102, %s103
      %p105 = scmp.eq.s32.totalorder %s104, 0
      %s107 = sadd.s32 %s106, 1
      %s108 = scalar_select %p105, %s106, %s107
      %p111 = pneg %p105
      %p112 = scmp.eq.s32.totalorder %s12, 1
      %p113 = por %p111, %p112
      %p114 = scmp.ne.s32.totalorder %s106, %s109
      %p115 = scmp.eq.s32.totalorder %s12, 0
      %p116 = por %p114, %p115
      %p117 = scmp.ne.s32.totalorder %s106, %s109
      %p118 = scmp.eq.s32.totalorder %s17, 1
      %p119 = por %p117, %p118
      %p120 = scmp.ne.s32.totalorder %s109, %s110
      %p121 = scmp.eq.s32.totalorder %s17, 0
      %p122 = por %p120, %p121
      %p123 = scmp.ne.s32.totalorder %s109, %s110
      %p124 = scmp.eq.s32.totalorder %s18, 1
      %p125 = por %p123, %p124
      %p127 = scmp.ne.s32.totalorder %s110, %s126
      %p128 = scmp.eq.s32.totalorder %s18, 0
      %p129 = por %p127, %p128
      %p130 = scmp.le.s32.totalorder 1, %s12
      %p131 = scmp.lt.s32.totalorder %s12, 3
      %p132 = pnand %p130, %p131
      %p133 = pneg %p132
      // Predicated region
      $region9: #{tpu_custom_call.1} parent=5 // pred_check
        _
      $region10: #{tpu_custom_call.1} parent=5 // pred_check_branch
        %135 = sbr.rel (%p132) target = $region12
      $region11: #{tpu_custom_call.1} parent=5 // pred_region
        %s136 = ssub.s32 %s12, 1
        // Predicated region
        $region13: #{tpu_custom_call.1} parent=11 // pred_check
          %p137 = pneg %p73
        $region14: #{tpu_custom_call.1} parent=11 // pred_check_branch
          %139 = sbr.rel (%p137) target = $region16
        $region15: #{tpu_custom_call.1} parent=11 // pred_region
          _
        $region16: #{tpu_custom_call.1} parent=11 // pred_fallthru
          _
        // Predicated region
        $region17: #{tpu_custom_call.1} parent=11 // pred_check
          %p140 = pneg %p94
        $region18: #{tpu_custom_call.1} parent=11 // pred_check_branch
          %142 = sbr.rel (%p140) target = $region20
        $region19: #{tpu_custom_call.1} parent=11 // pred_region
          _
        $region20: #{tpu_custom_call.1} parent=11 // pred_fallthru
          _
      $region12: #{tpu_custom_call.1} parent=5 // pred_fallthru
        _
      %p143 = scmp.lt.s32.totalorder %s12, 2
      // Predicated region
      $region21: #{tpu_custom_call.1} parent=5 // pred_check
        %p144 = pneg %p143
      $region22: #{tpu_custom_call.1} parent=5 // pred_check_branch
        %146 = sbr.rel (%p144) target = $region24
      $region23: #{tpu_custom_call.1} parent=5 // pred_region
        // Predicated region
        $region25: #{tpu_custom_call.1} parent=23 // pred_check
          %p147 = pneg %p46
        $region26: #{tpu_custom_call.1} parent=23 // pred_check_branch
          %149 = sbr.rel (%p147) target = $region28
        $region27: #{tpu_custom_call.1} parent=23 // pred_region
          %s150 = smul.u32 32, %s20
          %p151 = scmp.lt.s32.totalorder %s19, 1
          %s152 = scalar_select %p151, %s19, 1
          %p153 = scmp.lt.s32.totalorder %s150, 31
          %s154 = scalar_select %p153, %s150, 31
          %s155 = smul.addr %s152, 32
          %s156 = sadd.s32 %s154, %s155
          %s157 = smul.addr %s156, 8
          %s158 = scalar_lea.vmem %s0, %s157
          %s159 = smul.u32 32, %s20
        $region28: #{tpu_custom_call.1} parent=23 // pred_fallthru
          _
      $region24: #{tpu_custom_call.1} parent=5 // pred_fallthru
        _
      %p160 = scmp.le.s32.totalorder 1, %s12
      %p161 = scmp.lt.s32.totalorder %s12, 3
      %p162 = pnand %p160, %p161
      %p163 = pneg %p162
      // Predicated region
      $region29: #{tpu_custom_call.1} parent=5 // pred_check
        _
      $region30: #{tpu_custom_call.1} parent=5 // pred_check_branch
        %165 = sbr.rel (%p162) target = $region32
      $region31: #{tpu_custom_call.1} parent=5 // pred_region
        %s166 = ssub.s32 %s12, 1
        %s167 = smul.u32 32, %s22
        %p168 = scmp.lt.s32.totalorder %s21, 1
        %s169 = scalar_select %p168, %s21, 1
        %p170 = scmp.lt.s32.totalorder %s167, 31
        %s171 = scalar_select %p170, %s167, 31
        %s172 = smul.addr %s169, 32
        %s173 = sadd.s32 %s171, %s172
        %s174 = smul.addr %s173, 8
        %s175 = scalar_lea.vmem %s0, %s174
        %p176 = pneg %p52
        %p177 = pneg %p49
        %p178 = pneg %p73
        %p179 = pneg %p70
        %p180 = pneg %p94
        %p181 = pneg %p91
        %p182 = pneg %p122
        %p183 = pneg %p119
        %s184 = sand.u32 %s109, 1
        %s185 = scalar_lea.sflag [#allocation3], %s184
        %s186 = sand.u32 %s109, 1
        %s187 = smul.addr %s186, 256
        %s188 = scalar_lea.vmem [#allocation2], %s187
        %s189 = smul.u32 32, %s22
        %p190 = scmp.lt.s32.totalorder %s21, 1
        %s191 = scalar_select %p190, %s21, 1
        %p192 = scmp.lt.s32.totalorder %s189, 31
        %s193 = scalar_select %p192, %s189, 31
        %s194 = smul.addr %s191, 32
        %s195 = sadd.s32 %s193, %s194
        %s196 = smul.addr %s195, 8
        %s197 = scalar_lea.vmem %s0, %s196
        %s198 = smul.u32 32, %s22
        %s199 = smul.u32 32, %s22
        %v200 = vld [vmem:[%s197] sm:$0xff]
        %v201 = vld [vmem:[%s197 + $0x8] sm:$0xff]
        %v202 = vld [vmem:[%s197 + $0x10] sm:$0xff]
        %v203 = vld [vmem:[%s197 + $0x18] sm:$0xff]
        %v204 = vld [vmem:[%s197 + $0x20] sm:$0xff]
        %v205 = vld [vmem:[%s197 + $0x28] sm:$0xff]
        %v206 = vld [vmem:[%s197 + $0x30] sm:$0xff]
        %v207 = vld [vmem:[%s197 + $0x38] sm:$0xff]
        %v208 = vld [vmem:[%s197 + $0x40] sm:$0xff]
        %v209 = vld [vmem:[%s197 + $0x48] sm:$0xff]
        %v210 = vld [vmem:[%s197 + $0x50] sm:$0xff]
        %v211 = vld [vmem:[%s197 + $0x58] sm:$0xff]
        %v212 = vld [vmem:[%s197 + $0x60] sm:$0xff]
        %v213 = vld [vmem:[%s197 + $0x68] sm:$0xff]
        %v214 = vld [vmem:[%s197 + $0x70] sm:$0xff]
        %v215 = vld [vmem:[%s197 + $0x78] sm:$0xff]
        %v216 = vld [vmem:[%s197 + $0x80] sm:$0xff]
        %v217 = vld [vmem:[%s197 + $0x88] sm:$0xff]
        %v218 = vld [vmem:[%s197 + $0x90] sm:$0xff]
        %v219 = vld [vmem:[%s197 + $0x98] sm:$0xff]
        %v220 = vld [vmem:[%s197 + $0xa0] sm:$0xff]
        %v221 = vld [vmem:[%s197 + $0xa8] sm:$0xff]
        %v222 = vld [vmem:[%s197 + $0xb0] sm:$0xff]
        %v223 = vld [vmem:[%s197 + $0xb8] sm:$0xff]
        %v224 = vld [vmem:[%s197 + $0xc0] sm:$0xff]
        %v225 = vld [vmem:[%s197 + $0xc8] sm:$0xff]
        %v226 = vld [vmem:[%s197 + $0xd0] sm:$0xff]
        %v227 = vld [vmem:[%s197 + $0xd8] sm:$0xff]
        %v228 = vld [vmem:[%s197 + $0xe0] sm:$0xff]
        %v229 = vld [vmem:[%s197 + $0xe8] sm:$0xff]
        %v230 = vld [vmem:[%s197 + $0xf0] sm:$0xff]
        %v231 = vld [vmem:[%s197 + $0xf8] sm:$0xff]
        %v232 = vld [vmem:[%s1] sm:$0xff]
        %v233 = vld [vmem:[%s1 + $0x8] sm:$0xff]
        %v234 = vld [vmem:[%s1 + $0x10] sm:$0xff]
        %v235 = vld [vmem:[%s1 + $0x18] sm:$0xff]
        %v236 = vld [vmem:[%s1 + $0x20] sm:$0xff]
        %v237 = vld [vmem:[%s2] sm:$0x1]
        %v239 = vperm.slane %v237, 0
        %vm241 = vcmask 326656
        %v243 = vsel %vm241, %v200, 0
        %v246 = vsel %vm241, %v201, 0
        %v249 = vsel %vm241, %v202, 0
        %v252 = vsel %vm241, %v203, 0
        %v255 = vsel %vm241, %v204, 0
        %v258 = vsel %vm241, %v205, 0
        %v261 = vsel %vm241, %v206, 0
        %v264 = vsel %vm241, %v207, 0
        %v267 = vsel %vm241, %v208, 0
        %v270 = vsel %vm241, %v209, 0
        %v273 = vsel %vm241, %v210, 0
        %v276 = vsel %vm241, %v211, 0
        %v279 = vsel %vm241, %v212, 0
        %v282 = vsel %vm241, %v213, 0
        %v285 = vsel %vm241, %v214, 0
        %v288 = vsel %vm241, %v215, 0
        %v291 = vsel %vm241, %v216, 0
        %v294 = vsel %vm241, %v217, 0
        %v297 = vsel %vm241, %v218, 0
        %v300 = vsel %vm241, %v219, 0
        %v303 = vsel %vm241, %v220, 0
        %v306 = vsel %vm241, %v221, 0
        %v309 = vsel %vm241, %v222, 0
        %v312 = vsel %vm241, %v223, 0
        %v315 = vsel %vm241, %v224, 0
        %v318 = vsel %vm241, %v225, 0
        %v321 = vsel %vm241, %v226, 0
        %v324 = vsel %vm241, %v227, 0
        %v327 = vsel %vm241, %v228, 0
        %v330 = vsel %vm241, %v229, 0
        %v333 = vsel %vm241, %v230, 0
        %v336 = vsel %vm241, %v231, 0
        %338 = vmatpush.msra.mxu0 0.0
        %339 = vmatpush.msra.mxu0 0.0
        %340 = vmatpush.msra.mxu0 0.0
        %341 = vmatpush.msra.mxu0 0.0
        %342 = vmatpush.msra.mxu0 0.0
        %343 = vmatpush.msra.mxu0 0.0
        %344 = vmatpush.msra.mxu0 0.0
        %345 = vmatpush.msra.mxu0 0.0
        %346 = vmatpush.msra.mxu0 0.0
        %347 = vmatpush.msra.mxu0 0.0
        %348 = vmatpush.msra.mxu0 0.0
        %349 = vmatpush.msra.mxu0 %v236
        %350 = vmatpush.msra.mxu0 %v235
        %351 = vmatpush.msra.mxu0 %v234
        %352 = vmatpush.msra.mxu0 %v233
        %353 = vmatpush.msra.mxu0 %v232
        %354 = vmatmul.f32.gmra.mxu0 %v243
        %v355 = vpop.f32.mrf.mxu0
        %v356 = vadd.f32 %v239, %v355
        %357 = vmatmul.f32.gmra.mxu0 %v246
        %v358 = vpop.f32.mrf.mxu0
        %v359 = vadd.f32 %v239, %v358
        %360 = vmatmul.f32.gmra.mxu0 %v249
        %v361 = vpop.f32.mrf.mxu0
        %v362 = vadd.f32 %v239, %v361
        %363 = vmatmul.f32.gmra.mxu0 %v252
        %v364 = vpop.f32.mrf.mxu0
        %v365 = vadd.f32 %v239, %v364
        %366 = vmatmul.f32.gmra.mxu0 %v255
        %v367 = vpop.f32.mrf.mxu0
        %v368 = vadd.f32 %v239, %v367
        %369 = vmatmul.f32.gmra.mxu0 %v258
        %v370 = vpop.f32.mrf.mxu0
        %v371 = vadd.f32 %v239, %v370
        %372 = vmatmul.f32.gmra.mxu0 %v261
        %v373 = vpop.f32.mrf.mxu0
        %v374 = vadd.f32 %v239, %v373
        %375 = vmatmul.f32.gmra.mxu0 %v264
        %v376 = vpop.f32.mrf.mxu0
        %v377 = vadd.f32 %v239, %v376
        %378 = vmatmul.f32.gmra.mxu0 %v267
        %v379 = vpop.f32.mrf.mxu0
        %v380 = vadd.f32 %v239, %v379
        %381 = vmatmul.f32.gmra.mxu0 %v270
        %v382 = vpop.f32.mrf.mxu0
        %v383 = vadd.f32 %v239, %v382
        %384 = vmatmul.f32.gmra.mxu0 %v273
        %v385 = vpop.f32.mrf.mxu0
        %v386 = vadd.f32 %v239, %v385
        %387 = vmatmul.f32.gmra.mxu0 %v276
        %v388 = vpop.f32.mrf.mxu0
        %v389 = vadd.f32 %v239, %v388
        %390 = vmatmul.f32.gmra.mxu0 %v279
        %v391 = vpop.f32.mrf.mxu0
        %v392 = vadd.f32 %v239, %v391
        %393 = vmatmul.f32.gmra.mxu0 %v282
        %v394 = vpop.f32.mrf.mxu0
        %v395 = vadd.f32 %v239, %v394
        %396 = vmatmul.f32.gmra.mxu0 %v285
        %v397 = vpop.f32.mrf.mxu0
        %v398 = vadd.f32 %v239, %v397
        %399 = vmatmul.f32.gmra.mxu0 %v288
        %v400 = vpop.f32.mrf.mxu0
        %v401 = vadd.f32 %v239, %v400
        %402 = vmatmul.f32.gmra.mxu0 %v291
        %v403 = vpop.f32.mrf.mxu0
        %v404 = vadd.f32 %v239, %v403
        %405 = vmatmul.f32.gmra.mxu0 %v294
        %v406 = vpop.f32.mrf.mxu0
        %v407 = vadd.f32 %v239, %v406
        %408 = vmatmul.f32.gmra.mxu0 %v297
        %v409 = vpop.f32.mrf.mxu0
        %v410 = vadd.f32 %v239, %v409
        %411 = vmatmul.f32.gmra.mxu0 %v300
        %v412 = vpop.f32.mrf.mxu0
        %v413 = vadd.f32 %v239, %v412
        %414 = vmatmul.f32.gmra.mxu0 %v303
        %v415 = vpop.f32.mrf.mxu0
        %v416 = vadd.f32 %v239, %v415
        %417 = vmatmul.f32.gmra.mxu0 %v306
        %v418 = vpop.f32.mrf.mxu0
        %v419 = vadd.f32 %v239, %v418
        %420 = vmatmul.f32.gmra.mxu0 %v309
        %v421 = vpop.f32.mrf.mxu0
        %v422 = vadd.f32 %v239, %v421
        %423 = vmatmul.f32.gmra.mxu0 %v312
        %v424 = vpop.f32.mrf.mxu0
        %v425 = vadd.f32 %v239, %v424
        %426 = vmatmul.f32.gmra.mxu0 %v315
        %v427 = vpop.f32.mrf.mxu0
        %v428 = vadd.f32 %v239, %v427
        %429 = vmatmul.f32.gmra.mxu0 %v318
        %v430 = vpop.f32.mrf.mxu0
        %v431 = vadd.f32 %v239, %v430
        %432 = vmatmul.f32.gmra.mxu0 %v321
        %v433 = vpop.f32.mrf.mxu0
        %v434 = vadd.f32 %v239, %v433
        %435 = vmatmul.f32.gmra.mxu0 %v324
        %v436 = vpop.f32.mrf.mxu0
        %v437 = vadd.f32 %v239, %v436
        %438 = vmatmul.f32.gmra.mxu0 %v327
        %v439 = vpop.f32.mrf.mxu0
        %v440 = vadd.f32 %v239, %v439
        %441 = vmatmul.f32.gmra.mxu0 %v330
        %v442 = vpop.f32.mrf.mxu0
        %v443 = vadd.f32 %v239, %v442
        %444 = vmatmul.f32.gmra.mxu0 %v333
        %v445 = vpop.f32.mrf.mxu0
        %v446 = vadd.f32 %v239, %v445
        %447 = vmatmul.f32.gmra.mxu0 %v336
        %v448 = vpop.f32.mrf.mxu0
        %v449 = vadd.f32 %v239, %v448
        %450 = vdwg.mxu0
        %451 = vst [vmem:[%s188] sm:$0xff] %v356
        %452 = vst [vmem:[%s188 + $0x8] sm:$0xff] %v359
        %453 = vst [vmem:[%s188 + $0x10] sm:$0xff] %v362
        %454 = vst [vmem:[%s188 + $0x18] sm:$0xff] %v365
        %455 = vst [vmem:[%s188 + $0x20] sm:$0xff] %v368
        %456 = vst [vmem:[%s188 + $0x28] sm:$0xff] %v371
        %457 = vst [vmem:[%s188 + $0x30] sm:$0xff] %v374
        %458 = vst [vmem:[%s188 + $0x38] sm:$0xff] %v377
        %459 = vst [vmem:[%s188 + $0x40] sm:$0xff] %v380
        %460 = vst [vmem:[%s188 + $0x48] sm:$0xff] %v383
        %461 = vst [vmem:[%s188 + $0x50] sm:$0xff] %v386
        %462 = vst [vmem:[%s188 + $0x58] sm:$0xff] %v389
        %463 = vst [vmem:[%s188 + $0x60] sm:$0xff] %v392
        %464 = vst [vmem:[%s188 + $0x68] sm:$0xff] %v395
        %465 = vst [vmem:[%s188 + $0x70] sm:$0xff] %v398
        %466 = vst [vmem:[%s188 + $0x78] sm:$0xff] %v401
        %467 = vst [vmem:[%s188 + $0x80] sm:$0xff] %v404
        %468 = vst [vmem:[%s188 + $0x88] sm:$0xff] %v407
        %469 = vst [vmem:[%s188 + $0x90] sm:$0xff] %v410
        %470 = vst [vmem:[%s188 + $0x98] sm:$0xff] %v413
        %471 = vst [vmem:[%s188 + $0xa0] sm:$0xff] %v416
        %472 = vst [vmem:[%s188 + $0xa8] sm:$0xff] %v419
        %473 = vst [vmem:[%s188 + $0xb0] sm:$0xff] %v422
        %474 = vst [vmem:[%s188 + $0xb8] sm:$0xff] %v425
        %475 = vst [vmem:[%s188 + $0xc0] sm:$0xff] %v428
        %476 = vst [vmem:[%s188 + $0xc8] sm:$0xff] %v431
        %477 = vst [vmem:[%s188 + $0xd0] sm:$0xff] %v434
        %478 = vst [vmem:[%s188 + $0xd8] sm:$0xff] %v437
        %479 = vst [vmem:[%s188 + $0xe0] sm:$0xff] %v440
        %480 = vst [vmem:[%s188 + $0xe8] sm:$0xff] %v443
        %481 = vst [vmem:[%s188 + $0xf0] sm:$0xff] %v446
        %482 = vst [vmem:[%s188 + $0xf8] sm:$0xff] %v449
        %s483 = sand.u32 %s109, 1
        %s484 = scalar_lea.sflag [#allocation3], %s483
        %s485 = sand.u32 %s109, 1
        %s486 = smul.addr %s485, 256
        %s487 = scalar_lea.vmem [#allocation2], %s486
        // Predicated region
        $region33: #{tpu_custom_call.1} parent=31 // pred_check
          %p488 = pneg %p119
        $region34: #{tpu_custom_call.1} parent=31 // pred_check_branch
          %490 = sbr.rel (%p488) target = $region36
        $region35: #{tpu_custom_call.1} parent=31 // pred_region
          %s491 = smul.u32 32, %s22
          %493 = vsyncadd %s484, 0
          %s494 = smul.addr %s21, 32
          %s495 = sadd.s32 %s491, %s494
          %s496 = smul.addr %s495, 8
          %s497 = scalar_lea.hbm %s3, %s496
          %s498 = sshll.u32 %s487, 4
          %s499 = int_to_ptr.vmem [resolvable:$true] %s498
          %s500 = sshll.u32 %s497, 4
          %s501 = int_to_ptr.hbm [resolvable:$true] %s500
          %506 = dma.vmem_to_hbm [thread:$0]  %s499, 4096, %s501, %s484, 128, 128, 8
        $region36: #{tpu_custom_call.1} parent=31 // pred_fallthru
          _
      $region32: #{tpu_custom_call.1} parent=5 // pred_fallthru
        _
      %p507 = scmp.le.s32.totalorder 2, %s12
      // Predicated region
      $region37: #{tpu_custom_call.1} parent=5 // pred_check
        %p508 = pneg %p507
      $region38: #{tpu_custom_call.1} parent=5 // pred_check_branch
        %510 = sbr.rel (%p508) target = $region40
      $region39: #{tpu_custom_call.1} parent=5 // pred_region
        %s511 = ssub.s32 %s12, 2
        // Predicated region
        $region41: #{tpu_custom_call.1} parent=39 // pred_check
          %p512 = pneg %p125
        $region42: #{tpu_custom_call.1} parent=39 // pred_check_branch
          %514 = sbr.rel (%p512) target = $region44
        $region43: #{tpu_custom_call.1} parent=39 // pred_region
          %s515 = sand.u32 %s110, 1
          %s516 = scalar_lea.sflag [#allocation3], %s515
          %s517 = sand.u32 %s110, 1
          %s518 = smul.addr %s517, 256
          %s519 = scalar_lea.vmem [#allocation2], %s518
          %521 = dma.done %s516, 4096
        $region44: #{tpu_custom_call.1} parent=39 // pred_fallthru
          _
      $region40: #{tpu_custom_call.1} parent=5 // pred_fallthru
        _
    $region6: #{tpu_custom_call.1} parent=1 // loop_footer
      %s16 = sadd.s32 1, %s12
    $region7: #{tpu_custom_call.1} parent=1 // loop_footer_branch
      %11 = sbr.rel target = $region3
    $region8: #{tpu_custom_call.1} parent=1 // loop_exit
      _
    %522 = vsyncpa [#allocation3], 1
    %s523 = scalar_lea.sflag [#allocation3], 1
    %524 = vsyncpa %s523, 1

</llo_original>
